<compile_context>
chip_gen: v7x
topology: tpu7x:2x2x1
jax: 0.10.0
libtpu: 0.0.40
codegen_flags: <defaults>
</compile_context>

<pallas_src>
import functools

import jax
import jax.numpy as jnp
import numpy as np
from jax import lax
from jax.experimental import pallas as pl
from jax.experimental.pallas import tpu as pltpu


def _round_up(x, m):
    return ((x + m - 1) // m) * m


def conv_bn_leaky_kernel(w_ref, p_ref, b_ref, o_ref, *, alpha):
    # (OC, Kp) @ (Kp, tm) on the MXU (bf16 in, f32 accumulate). Output block
    # is (OC, tm): the wide M dimension sits in lanes -> unmasked stores.
    acc = jnp.dot(w_ref[...], p_ref[...], preferred_element_type=jnp.float32)
    y = acc + b_ref[...]                       # folded BatchNorm bias (per OC row)
    o_ref[...] = jnp.where(y > 0, y, alpha * y).astype(o_ref.dtype)


def convolutional_forward(x, weight, gamma, beta, running_mean, running_var,
                          *, stride, eps=1e-5, leaky=0.1):
    """x: (N, C, H, W) f32, weight: (OC, C, k, k) f32. Returns (N, OC, OH, OW)."""
    N, C, H, W = x.shape
    OC, _, k, _ = weight.shape
    pad = (k - 1) // 2
    OH = (H + 2 * pad - k) // stride + 1
    OW = (W + 2 * pad - k) // stride + 1
    M = N * OH * OW
    K = k * k * C

    # ---- glue: im2col, laid out transposed as (K, M) so M is the lane axis ----
    x_nhwc = jnp.transpose(x, (0, 2, 3, 1)).astype(jnp.float32)
    xp = jnp.pad(x_nhwc, ((0, 0), (pad, pad), (pad, pad), (0, 0)))
    cols = []
    for kh in range(k):
        for kw in range(k):
            sl = xp[:, kh:kh + (OH - 1) * stride + 1:stride,
                       kw:kw + (OW - 1) * stride + 1:stride, :]
            cols.append(sl)                           # (N, OH, OW, C)
    p_t = jnp.stack(cols, axis=0)                     # (k*k, N, OH, OW, C)
    p_t = jnp.transpose(p_t, (0, 4, 1, 2, 3))         # (k*k, C, N, OH, OW)
    p_t = p_t.reshape(K, M)                           # K rows ordered (kh, kw, c)

    # weight (OC, C, kh, kw) -> (OC, kh, kw, C) -> (OC, K), matching row order
    w_mat = jnp.transpose(weight, (0, 2, 3, 1)).reshape(OC, K).astype(jnp.float32)

    # fold BatchNorm (eval) scale into the weights; keep a per-OC bias vector
    inv_std = 1.0 / jnp.sqrt(running_var.astype(jnp.float32) + eps)
    bn_scale = (gamma * inv_std).astype(jnp.float32)                  # (OC,)
    bn_bias = (beta - running_mean * gamma * inv_std).astype(jnp.float32)
    w_mat = w_mat * bn_scale[:, None]
    bias = bn_bias.reshape(OC, 1)

    # pad K to a multiple of 128 (clean MXU contraction / lane-dense W rows),
    # pick a large M tile but keep >=2 grid steps for v7x's two TensorCores.
    Kp = _round_up(K, 128)
    M128 = _round_up(M, 128)
    tm = min(512, M128)
    if M128 >= 256:
        tm = min(tm, _round_up(M128 // 2, 128))
    Mp = _round_up(M, tm)

    p_t = jnp.pad(p_t, ((0, Kp - K), (0, Mp - M))).astype(jnp.bfloat16)
    w_mat = jnp.pad(w_mat, ((0, 0), (0, Kp - K))).astype(jnp.bfloat16)

    grid_m = Mp // tm
    cost = pl.CostEstimate(
        flops=2 * OC * Kp * Mp,
        transcendentals=0,
        bytes_accessed=(p_t.size * 2 + w_mat.size * 2
                        + bias.size * 4 + OC * Mp * 4))
    # double-buffered P tile + out tile, resident W + bias, 2x headroom
    vmem_need = 2 * Kp * tm * 2 + 2 * OC * tm * 4 + OC * Kp * 2 + OC * 4
    vmem_limit = int(min(64 * 1024 * 1024, max(8 * 1024 * 1024, 2 * vmem_need)))

    out = pl.pallas_call(
        functools.partial(conv_bn_leaky_kernel, alpha=leaky),
        out_shape=jax.ShapeDtypeStruct((OC, Mp), jnp.float32),
        grid_spec=pltpu.PrefetchScalarGridSpec(
            num_scalar_prefetch=0,
            grid=(grid_m,),
            in_specs=[
                pl.BlockSpec((OC, Kp), lambda i: (0, 0)),   # resident folded weights
                pl.BlockSpec((Kp, tm), lambda i: (0, i)),   # streamed im2col tile
                pl.BlockSpec((OC, 1), lambda i: (0, 0)),    # resident BN bias
            ],
            out_specs=pl.BlockSpec((OC, tm), lambda i: (0, i)),
        ),
        compiler_params=pltpu.CompilerParams(
            dimension_semantics=("parallel",),
            vmem_limit_bytes=vmem_limit),
        cost_estimate=cost,
    )(w_mat, p_t, bias)

    out = out[:, :M].reshape(OC, N, OH, OW)
    return jnp.transpose(out, (1, 0, 2, 3))               # back to NCHW


def _reference_forward(x, weight, gamma, beta, rm, rv, *, stride, eps=1e-5, leaky=0.1):
    pad = (weight.shape[2] - 1) // 2
    y = lax.conv_general_dilated(
        x.astype(jnp.float32), weight.astype(jnp.float32),
        window_strides=(stride, stride),
        padding=((pad, pad), (pad, pad)),
        dimension_numbers=("NCHW", "OIHW", "NCHW"))
    y = (y - rm[None, :, None, None]) / jnp.sqrt(rv[None, :, None, None] + eps)
    y = y * gamma[None, :, None, None] + beta[None, :, None, None]
    return jnp.where(y > 0, y, leaky * y)


if __name__ == "__main__":
    # Shapes consistent with Convolutional(in_channel=4, out_channel=8,
    # kernel_size=3, stride=1): x is NCHW (2, 4, 16, 16).
    N, C, H, W = 2, 4, 16, 16
    OC, k, stride = 8, 3, 1

    key = jax.random.PRNGKey(0)
    kx, kw, kg, kb, km, kv = jax.random.split(key, 6)
    x = jax.random.normal(kx, (N, C, H, W), jnp.float32)
    weight = 0.1 * jax.random.normal(kw, (OC, C, k, k), jnp.float32)
    gamma = jax.random.uniform(kg, (OC,), jnp.float32, 0.5, 1.5)
    beta = 0.1 * jax.random.normal(kb, (OC,), jnp.float32)
    running_mean = 0.1 * jax.random.normal(km, (OC,), jnp.float32)
    running_var = jax.random.uniform(kv, (OC,), jnp.float32, 0.5, 1.5)

    out = convolutional_forward(x, weight, gamma, beta, running_mean,
                                running_var, stride=stride, leaky=0.1)
    out = jax.block_until_ready(out)

    ref = _reference_forward(x, weight, gamma, beta, running_mean, running_var,
                             stride=stride, leaky=0.1)
    assert out.shape == (N, OC, H, W), out.shape
    # bf16 MXU inputs (f32 accumulation) -> slightly looser tolerance than pure f32
    np.testing.assert_allclose(np.asarray(out), np.asarray(ref),
                               rtol=2e-2, atol=2e-2)
    print("KERNEL_OK")
</pallas_src>

<mosaic_0001>
module attributes {stable_mosaic.version = 11 : i64} {
  func.func @conv_bn_leaky_kernel(%arg0: i32, %arg1: memref<8x128xbf16, #tpu.memory_space<vmem>>, %arg2: memref<128x256xbf16, #tpu.memory_space<vmem>>, %arg3: memref<8x1xf32, #tpu.memory_space<vmem>>, %arg4: memref<8x256xf32, #tpu.memory_space<vmem>>) attributes {dimension_semantics = [#tpu.dimension_semantics<parallel>], iteration_bounds = array<i64: 2>, scalar_prefetch = 0 : i64, scratch_operands = 0 : i64, tpu.core_type = #tpu.core_type<tc>, window_params = [{pipeline_mode = #tpu.pipeline_mode<synchronous>, transform_indices = @transform_0, window_bounds = array<i64: 8, 128>}, {transform_indices = @transform_1, window_bounds = array<i64: 128, 256>}, {pipeline_mode = #tpu.pipeline_mode<synchronous>, transform_indices = @transform_2, window_bounds = array<i64: 8, 1>}, {transform_indices = @transform_3, window_bounds = array<i64: 8, 256>}]} {
    %c0 = arith.constant 0 : index
    %c0_0 = arith.constant 0 : index
    %0 = vector.load %arg1[%c0, %c0_0] : memref<8x128xbf16, #tpu.memory_space<vmem>>, vector<8x128xbf16>
    %c0_1 = arith.constant 0 : index
    %c0_2 = arith.constant 0 : index
    %1 = vector.load %arg2[%c0_1, %c0_2] : memref<128x256xbf16, #tpu.memory_space<vmem>>, vector<128x256xbf16>
    %cst = arith.constant dense<0.000000e+00> : vector<8x256xf32>
    %2 = tpu.matmul %0, %1, %cst {dimension_numbers = #tpu.dot_dimension_numbers<[1], [0], [0], [1], [0, 0, 1, 1], [], []>} : vector<8x128xbf16>, vector<128x256xbf16>, vector<8x256xf32> -> vector<8x256xf32>
    %c0_3 = arith.constant 0 : index
    %c0_4 = arith.constant 0 : index
    %3 = vector.load %arg3[%c0_3, %c0_4] : memref<8x1xf32, #tpu.memory_space<vmem>>, vector<8x1xf32>
    %4 = vector.broadcast %3 : vector<8x1xf32> to vector<8x256xf32>
    %5 = arith.addf %2, %4 : vector<8x256xf32>
    %cst_5 = arith.constant 0.000000e+00 : f32
    %6 = vector.broadcast %cst_5 : f32 to vector<8x256xf32>
    %7 = arith.cmpf ogt, %5, %6 : vector<8x256xf32>
    %cst_6 = arith.constant 1.000000e-01 : f32
    %8 = vector.broadcast %cst_6 : f32 to vector<8x256xf32>
    %9 = arith.mulf %8, %5 : vector<8x256xf32>
    %10 = arith.select %7, %5, %9 : vector<8x256xi1>, vector<8x256xf32>
    %c0_7 = arith.constant 0 : index
    %c0_8 = arith.constant 0 : index
    %11 = vector.load %arg4[%c0_7, %c0_8] : memref<8x256xf32, #tpu.memory_space<vmem>>, vector<8x256xf32>
    tpu.vector_store %arg4[%c0_7, %c0_8], %10 {strides = array<i32>} : memref<8x256xf32, #tpu.memory_space<vmem>>, vector<8x256xf32>,
    return
  }
  func.func @transform_0(%arg0: i32) -> (i32, i32) {
    %c0_i32 = arith.constant 0 : i32
    %c0_i32_0 = arith.constant 0 : i32
    %c0_i32_1 = arith.constant 0 : i32
    return %c0_i32, %c0_i32_0 : i32, i32
  }
  func.func @transform_1(%arg0: i32) -> (i32, i32) {
    %c0_i32 = arith.constant 0 : i32
    %c0_i32_0 = arith.constant 0 : i32
    return %c0_i32, %arg0 : i32, i32
  }
  func.func @transform_2(%arg0: i32) -> (i32, i32) {
    %c0_i32 = arith.constant 0 : i32
    %c0_i32_0 = arith.constant 0 : i32
    %c0_i32_1 = arith.constant 0 : i32
    return %c0_i32, %c0_i32_0 : i32, i32
  }
  func.func @transform_3(%arg0: i32) -> (i32, i32) {
    %c0_i32 = arith.constant 0 : i32
    %c0_i32_0 = arith.constant 0 : i32
    return %c0_i32, %arg0 : i32, i32
  }
}

</mosaic_0001>

<llo_original>
// kernel: tpu_custom_call.1
$region0: #{tpu_custom_call.1}
  #allocation0 [shape = 'u32[]', space=smem, size = 0x4, offset = 0x4, fixed_abs, tag = 'smem constant byte address 0x4 - core index']
  #allocation1 [shape = 'u32[144,128]{1,0:T(1,128)}', space=vmem, size = 0x12000, scoped, tag = 'internal scratch']
  %s0 = inlined_call_operand.vmem [shape: bf16[8,128], index: 0, kind: input, shape index: {}]
  %s1 = inlined_call_operand.hbm [shape: bf16[128,512], index: 1, kind: input, shape index: {}]
  %s2 = inlined_call_operand.vmem [shape: f32[8,1], index: 2, kind: input, shape index: {}]
  %s3 = inlined_call_operand.hbm [shape: f32[8,512], index: 3, kind: output, shape index: {}]
  %s4 = sld [smem:[#allocation0]]
  $region49: #{tpu_custom_call.1} parent=0
    _
  %s6 = ssub.s32 1, %s4
  %s7 = scalar_select 0, %s6, %s4
  $region1: #{tpu_custom_call.1} parent=0
    #allocation2 [shape = 'u8[131072]{0}', space=vmem, size = 0x20000, scoped, tag = 'input window, operand 1']
    #allocation3 [shape = 's32[2]{0}', space=sflag, size = 0x8, scoped, tag = 'scoped memory for tpu_custom_call.1']
    #allocation4 [shape = 's32[2]{0}', space=sflag, size = 0x8, scoped, tag = 'scoped memory for tpu_custom_call.1']
    #allocation5 [shape = 'u8[16384]{0}', space=vmem, size = 0x4000, scoped, tag = 'output window, operand 0']
    %8 = vsyncpa [#allocation3], 0
    %s9 = scalar_lea.sflag [#allocation3], 1
    %10 = vsyncpa %s9, 0
    %11 = vsyncpa [#allocation4], 0
    %s12 = scalar_lea.sflag [#allocation4], 1
    %13 = vsyncpa %s12, 0
    loop: start=0, step=1, limit=4
    $region2: #{tpu_custom_call.1} parent=1 // loop_pre_header
      _
    $region3: #{tpu_custom_call.1} parent=1 // loop_header
      %s15 = sphi 0, %s19
      %p16 = scmp.ge.s32.totalorder %s15, 4
      %s23 = sphi 0, %s23
      %s25 = sphi 0, %s23
      %s26 = sphi 0, %s25
      %s40 = sphi 0, %s26
      %s46 = sphi 0, %s48
      %s49 = sphi 0, %s46
      %s50 = sphi 0, %s49
      %s66 = sphi 0, %s50
      %s70 = sphi 0, %s70
      %s72 = sphi 0, %s70
      %s73 = sphi 0, %s72
      %s87 = sphi 0, %s73
      %s93 = sphi 0, %s95
      %s96 = sphi 0, %s93
      %s97 = sphi 0, %s96
      %s113 = sphi 0, %s97
    $region4: #{tpu_custom_call.1} parent=1 // loop_header_branch
      %18 = sbr.rel (%p16) target = $region8
    $region5: #{tpu_custom_call.1} parent=1 // loop_body
      %s20 = ssub.s32 %s15, 1
      %s21 = ssub.s32 %s15, 2
      %s22 = sadd.s32 %s15, 1
      %s24 = sadd.s32 %s23, 1
      %p27 = scmp.eq.s32.totalorder %s15, 1
      %p28 = scmp.ne.s32.totalorder %s23, %s25
      %p29 = scmp.eq.s32.totalorder %s15, 0
      %p30 = por %p28, %p29
      %p31 = scmp.ne.s32.totalorder %s23, %s25
      %p32 = scmp.eq.s32.totalorder %s20, 1
      %p33 = por %p31, %p32
      %p34 = scmp.ne.s32.totalorder %s25, %s26
      %p35 = scmp.eq.s32.totalorder %s20, 0
      %p36 = por %p34, %p35
      %p37 = scmp.ne.s32.totalorder %s25, %s26
      %p38 = scmp.eq.s32.totalorder %s21, 1
      %p39 = por %p37, %p38
      %p41 = scmp.ne.s32.totalorder %s26, %s40
      %p42 = scmp.eq.s32.totalorder %s21, 0
      %p43 = por %p41, %p42
      %s44 = ssub.s32 %s15, %s22
      %p45 = scmp.eq.s32.totalorder %s44, 0
      %s47 = sadd.s32 %s46, 1
      %s48 = scalar_select %p45, %s46, %s47
      %p51 = pneg %p45
      %p52 = scmp.eq.s32.totalorder %s15, 1
      %p53 = por %p51, %p52
      %p54 = scmp.ne.s32.totalorder %s46, %s49
      %p55 = scmp.eq.s32.totalorder %s15, 0
      %p56 = por %p54, %p55
      %p57 = scmp.ne.s32.totalorder %s46, %s49
      %p58 = scmp.eq.s32.totalorder %s20, 1
      %p59 = por %p57, %p58
      %p60 = scmp.ne.s32.totalorder %s49, %s50
      %p61 = scmp.eq.s32.totalorder %s20, 0
      %p62 = por %p60, %p61
      %p63 = scmp.ne.s32.totalorder %s49, %s50
      %p64 = scmp.eq.s32.totalorder %s21, 1
      %p65 = por %p63, %p64
      %p67 = scmp.ne.s32.totalorder %s50, %s66
      %p68 = scmp.eq.s32.totalorder %s21, 0
      %p69 = por %p67, %p68
      %s71 = sadd.s32 %s70, 1
      %p74 = scmp.eq.s32.totalorder %s15, 1
      %p75 = scmp.ne.s32.totalorder %s70, %s72
      %p76 = scmp.eq.s32.totalorder %s15, 0
      %p77 = por %p75, %p76
      %p78 = scmp.ne.s32.totalorder %s70, %s72
      %p79 = scmp.eq.s32.totalorder %s20, 1
      %p80 = por %p78, %p79
      %p81 = scmp.ne.s32.totalorder %s72, %s73
      %p82 = scmp.eq.s32.totalorder %s20, 0
      %p83 = por %p81, %p82
      %p84 = scmp.ne.s32.totalorder %s72, %s73
      %p85 = scmp.eq.s32.totalorder %s21, 1
      %p86 = por %p84, %p85
      %p88 = scmp.ne.s32.totalorder %s73, %s87
      %p89 = scmp.eq.s32.totalorder %s21, 0
      %p90 = por %p88, %p89
      %s91 = ssub.s32 %s15, %s22
      %p92 = scmp.eq.s32.totalorder %s91, 0
      %s94 = sadd.s32 %s93, 1
      %s95 = scalar_select %p92, %s93, %s94
      %p98 = pneg %p92
      %p99 = scmp.eq.s32.totalorder %s15, 1
      %p100 = por %p98, %p99
      %p101 = scmp.ne.s32.totalorder %s93, %s96
      %p102 = scmp.eq.s32.totalorder %s15, 0
      %p103 = por %p101, %p102
      %p104 = scmp.ne.s32.totalorder %s93, %s96
      %p105 = scmp.eq.s32.totalorder %s20, 1
      %p106 = por %p104, %p105
      %p107 = scmp.ne.s32.totalorder %s96, %s97
      %p108 = scmp.eq.s32.totalorder %s20, 0
      %p109 = por %p107, %p108
      %p110 = scmp.ne.s32.totalorder %s96, %s97
      %p111 = scmp.eq.s32.totalorder %s21, 1
      %p112 = por %p110, %p111
      %p114 = scmp.ne.s32.totalorder %s97, %s113
      %p115 = scmp.eq.s32.totalorder %s21, 0
      %p116 = por %p114, %p115
      %p117 = scmp.le.s32.totalorder 1, %s15
      %p118 = scmp.lt.s32.totalorder %s15, 3
      %p119 = pnand %p117, %p118
      %p120 = pneg %p119
      // Predicated region
      $region9: #{tpu_custom_call.1} parent=5 // pred_check
        _
      $region10: #{tpu_custom_call.1} parent=5 // pred_check_branch
        %122 = sbr.rel (%p119) target = $region12
      $region11: #{tpu_custom_call.1} parent=5 // pred_region
        %s123 = ssub.s32 %s15, 1
        // Predicated region
        $region13: #{tpu_custom_call.1} parent=11 // pred_check
          %p124 = pneg %p36
        $region14: #{tpu_custom_call.1} parent=11 // pred_check_branch
          %126 = sbr.rel (%p124) target = $region16
        $region15: #{tpu_custom_call.1} parent=11 // pred_region
          _
        $region16: #{tpu_custom_call.1} parent=11 // pred_fallthru
          _
        // Predicated region
        $region17: #{tpu_custom_call.1} parent=11 // pred_check
          %p127 = pneg %p83
        $region18: #{tpu_custom_call.1} parent=11 // pred_check_branch
          %129 = sbr.rel (%p127) target = $region20
        $region19: #{tpu_custom_call.1} parent=11 // pred_region
          _
        $region20: #{tpu_custom_call.1} parent=11 // pred_fallthru
          _
      $region12: #{tpu_custom_call.1} parent=5 // pred_fallthru
        _
      %p130 = scmp.lt.s32.totalorder %s15, 2
      // Predicated region
      $region21: #{tpu_custom_call.1} parent=5 // pred_check
        %p131 = pneg %p130
      $region22: #{tpu_custom_call.1} parent=5 // pred_check_branch
        %133 = sbr.rel (%p131) target = $region24
      $region23: #{tpu_custom_call.1} parent=5 // pred_region
        // Predicated region
        $region25: #{tpu_custom_call.1} parent=23 // pred_check
          %p134 = pneg %p56
        $region26: #{tpu_custom_call.1} parent=23 // pred_check_branch
          %136 = sbr.rel (%p134) target = $region28
        $region27: #{tpu_custom_call.1} parent=23 // pred_region
          %s137 = sand.u32 %s46, 1
          %s138 = scalar_lea.sflag [#allocation3], %s137
          %s139 = sand.u32 %s46, 1
          %s140 = smul.addr %s139, 128
          %s141 = scalar_lea.vmem [#allocation2], %s140
          %s142 = smul.u32 2, %s15
          %s144 = ssub.s32 2048, 2048
          %145 = vsyncadd %s138, %s144
          %s146 = smul.addr %s142, 64
          %s147 = scalar_lea.hbm %s1, %s146
          %s148 = sshll.u32 %s141, 4
          %s149 = int_to_ptr.vmem [resolvable:$true] %s148
          %154 = dma.hbm_to_vmem [thread:$0]  %s147, 2048, %s149, %s138, 256, 128, 8
        $region28: #{tpu_custom_call.1} parent=23 // pred_fallthru
          _
      $region24: #{tpu_custom_call.1} parent=5 // pred_fallthru
        _
      %p155 = scmp.le.s32.totalorder 1, %s15
      %p156 = scmp.lt.s32.totalorder %s15, 3
      %p157 = pnand %p155, %p156
      %p158 = pneg %p157
      // Predicated region
      $region29: #{tpu_custom_call.1} parent=5 // pred_check
        _
      $region30: #{tpu_custom_call.1} parent=5 // pred_check_branch
        %160 = sbr.rel (%p157) target = $region32
      $region31: #{tpu_custom_call.1} parent=5 // pred_region
        %s161 = ssub.s32 %s15, 1
        %s162 = sand.u32 %s49, 1
        %s163 = scalar_lea.sflag [#allocation3], %s162
        %s164 = sand.u32 %s49, 1
        %s165 = smul.addr %s164, 128
        %s166 = scalar_lea.vmem [#allocation2], %s165
        // Predicated region
        $region33: #{tpu_custom_call.1} parent=31 // pred_check
          %p167 = pneg %p62
        $region34: #{tpu_custom_call.1} parent=31 // pred_check_branch
          %169 = sbr.rel (%p167) target = $region36
        $region35: #{tpu_custom_call.1} parent=31 // pred_region
          %170 = dma.done %s163, 2048
        $region36: #{tpu_custom_call.1} parent=31 // pred_fallthru
          _
        %p171 = pneg %p36
        %p172 = pneg %p33
        %s173 = sand.u32 %s49, 1
        %s174 = scalar_lea.sflag [#allocation3], %s173
        %s175 = sand.u32 %s49, 1
        %s176 = smul.addr %s175, 128
        %s177 = scalar_lea.vmem [#allocation2], %s176
        %p178 = pneg %p62
        %p179 = pneg %p59
        %p180 = pneg %p83
        %p181 = pneg %p80
        %p182 = pneg %p109
        %p183 = pneg %p106
        %s184 = sand.u32 %s96, 1
        %s185 = scalar_lea.sflag [#allocation4], %s184
        %s186 = sand.u32 %s96, 1
        %s187 = smul.addr %s186, 16
        %s188 = scalar_lea.vmem [#allocation5], %s187
        %s189 = smul.u32 2, %s20
        %s190 = smul.u32 2, %s20
        %v192 = vld [vmem:[%s0] sm:$0xf]
        %v193 = vld [vmem:[%s166] sm:$0xff]
        %v194 = vld [vmem:[%s166 + $0x8] sm:$0xff]
        %v195 = vld [vmem:[%s166 + $0x10] sm:$0xff]
        %v196 = vld [vmem:[%s166 + $0x18] sm:$0xff]
        %v197 = vld [vmem:[%s166 + $0x20] sm:$0xff]
        %v198 = vld [vmem:[%s166 + $0x28] sm:$0xff]
        %v199 = vld [vmem:[%s166 + $0x30] sm:$0xff]
        %v200 = vld [vmem:[%s166 + $0x38] sm:$0xff]
        %v201 = vld [vmem:[%s166 + $0x40] sm:$0xff]
        %v202 = vld [vmem:[%s166 + $0x48] sm:$0xff]
        %v203 = vld [vmem:[%s166 + $0x50] sm:$0xff]
        %v204 = vld [vmem:[%s166 + $0x58] sm:$0xff]
        %v205 = vld [vmem:[%s166 + $0x60] sm:$0xff]
        %v206 = vld [vmem:[%s166 + $0x68] sm:$0xff]
        %v207 = vld [vmem:[%s166 + $0x70] sm:$0xff]
        %v208 = vld [vmem:[%s166 + $0x78] sm:$0xff]
        %v209 = vld [vmem:[%s2] sm:$0xff]
        %211 = vset.pattern.permute.xlu0 0
        %212 = vperm.xlu0 %211, %v209
        %v213 = vpop.permute.xlu0 %212
        %v231 = vunpack.c.l.b16 %v193
        %v232 = vunpack.c.h.b16 %v193
        %v233 = vunpack.c.l.b16 %v194
        %v234 = vunpack.c.h.b16 %v194
        %v235 = vunpack.c.l.b16 %v195
        %v236 = vunpack.c.h.b16 %v195
        %v237 = vunpack.c.l.b16 %v196
        %v238 = vunpack.c.h.b16 %v196
        %v239 = vunpack.c.l.b16 %v197
        %v240 = vunpack.c.h.b16 %v197
        %v241 = vunpack.c.l.b16 %v198
        %v242 = vunpack.c.h.b16 %v198
        %v243 = vunpack.c.l.b16 %v199
        %v244 = vunpack.c.h.b16 %v199
        %v245 = vunpack.c.l.b16 %v200
        %v246 = vunpack.c.h.b16 %v200
        %v247 = vunpack.c.l.b16 %v201
        %v248 = vunpack.c.h.b16 %v201
        %v249 = vunpack.c.l.b16 %v202
        %v250 = vunpack.c.h.b16 %v202
        %v251 = vunpack.c.l.b16 %v203
        %v252 = vunpack.c.h.b16 %v203
        %v253 = vunpack.c.l.b16 %v204
        %v254 = vunpack.c.h.b16 %v204
        %v255 = vunpack.c.l.b16 %v205
        %v256 = vunpack.c.h.b16 %v205
        %v257 = vunpack.c.l.b16 %v206
        %v258 = vunpack.c.h.b16 %v206
        %v259 = vunpack.c.l.b16 %v207
        %v260 = vunpack.c.h.b16 %v207
        %v261 = vunpack.c.l.b16 %v208
        %v262 = vunpack.c.h.b16 %v208
        %v263 = vpack.c.b16 %v233, %v231
        %v264 = vpack.c.b16 %v234, %v232
        %v265 = vpack.c.b16 %v237, %v235
        %v266 = vpack.c.b16 %v238, %v236
        %v267 = vpack.c.b16 %v241, %v239
        %v268 = vpack.c.b16 %v242, %v240
        %v269 = vpack.c.b16 %v245, %v243
        %v270 = vpack.c.b16 %v246, %v244
        %v271 = vpack.c.b16 %v249, %v247
        %v272 = vpack.c.b16 %v250, %v248
        %v273 = vpack.c.b16 %v253, %v251
        %v274 = vpack.c.b16 %v254, %v252
        %v275 = vpack.c.b16 %v257, %v255
        %v276 = vpack.c.b16 %v258, %v256
        %v277 = vpack.c.b16 %v261, %v259
        %v278 = vpack.c.b16 %v262, %v260
        %295 = vmatprep.subr.bf16.mxu0 %v264
        %296 = vmatpush1.bf16.msra.mxu0 %v263
        %297 = vmatprep.subr.bf16.mxu0 %v266
        %298 = vmatpush1.bf16.msra.mxu0 %v265
        %299 = vmatprep.subr.bf16.mxu0 %v268
        %300 = vmatpush1.bf16.msra.mxu0 %v267
        %301 = vmatprep.subr.bf16.mxu0 %v270
        %302 = vmatpush1.bf16.msra.mxu0 %v269
        %303 = vmatprep.subr.bf16.mxu0 %v272
        %304 = vmatpush1.bf16.msra.mxu0 %v271
        %305 = vmatprep.subr.bf16.mxu0 %v274
        %306 = vmatpush1.bf16.msra.mxu0 %v273
        %307 = vmatprep.subr.bf16.mxu0 %v276
        %308 = vmatpush1.bf16.msra.mxu0 %v275
        %309 = vmatprep.subr.bf16.mxu0 %v278
        %310 = vmatpush1.bf16.msra.mxu0 %v277
        %311 = vmatprep.subr.bf16.mxu0 0
        %312 = vmatpush1.bf16.msra.mxu0 0
        %313 = vmatprep.subr.bf16.mxu0 0
        %314 = vmatpush1.bf16.msra.mxu0 0
        %315 = vmatprep.subr.bf16.mxu0 0
        %316 = vmatpush1.bf16.msra.mxu0 0
        %317 = vmatprep.subr.bf16.mxu0 0
        %318 = vmatpush1.bf16.msra.mxu0 0
        %319 = vmatprep.subr.bf16.mxu0 0
        %320 = vmatpush1.bf16.msra.mxu0 0
        %321 = vmatprep.subr.bf16.mxu0 0
        %322 = vmatpush1.bf16.msra.mxu0 0
        %323 = vmatprep.subr.bf16.mxu0 0
        %324 = vmatpush1.bf16.msra.mxu0 0
        %325 = vmatprep.subr.bf16.mxu0 0
        %326 = vmatpush1.bf16.msra.mxu0 0
        %327 = vmatprep.mubr.bf16.mxu0 0
        %328 = vmatmul.mubr.bf16.gmra.mrb[0].mxu0 %v192
        %v329 = vpop.f32.mrb[0].mxu0
        %v330 = vadd.f32 %v213, %v329
        %v331 = vpop.f32.mrb[0].mxu0
        %v332 = vadd.f32 %v213, %v331
        %v333 = vpop.f32.mrb[0].mxu0
        %v334 = vpop.f32.mrb[0].mxu0
        %335 = vdwg.mxu0
        %vm336 = vcmp.gt.f32.partialorder %v330, 0.0
        %vm337 = vcmp.gt.f32.partialorder %v332, 0.0
        %v338 = vmul.f32 %v330, 0.1
        %v339 = vmul.f32 %v332, 0.1
        %v340 = vsel %vm336, %v330, %v338
        %v341 = vsel %vm337, %v332, %v339
        %342 = vst [vmem:[%s188] sm:$0xff] %v340
        %343 = vst [vmem:[%s188 + $0x8] sm:$0xff] %v341
        %s344 = sand.u32 %s96, 1
        %s345 = scalar_lea.sflag [#allocation4], %s344
        %s346 = sand.u32 %s96, 1
        %s347 = smul.addr %s346, 16
        %s348 = scalar_lea.vmem [#allocation5], %s347
        // Predicated region
        $region37: #{tpu_custom_call.1} parent=31 // pred_check
          %p349 = pneg %p106
        $region38: #{tpu_custom_call.1} parent=31 // pred_check_branch
          %351 = sbr.rel (%p349) target = $region40
        $region39: #{tpu_custom_call.1} parent=31 // pred_region
          %s352 = smul.u32 2, %s20
          %s354 = ssub.s32 256, 256
          %355 = vsyncadd %s345, %s354
          %s356 = smul.addr %s352, 128
          %s357 = scalar_lea.hbm %s3, %s356
          %s359 = sshll.u32 %s348, 4
          %s360 = int_to_ptr.vmem [resolvable:$true] %s359
          %362 = dma.vmem_to_hbm [thread:$0]  %s360, 256, %s357, %s345
        $region40: #{tpu_custom_call.1} parent=31 // pred_fallthru
          _
      $region32: #{tpu_custom_call.1} parent=5 // pred_fallthru
        _
      %p363 = scmp.le.s32.totalorder 2, %s15
      // Predicated region
      $region41: #{tpu_custom_call.1} parent=5 // pred_check
        %p364 = pneg %p363
      $region42: #{tpu_custom_call.1} parent=5 // pred_check_branch
        %366 = sbr.rel (%p364) target = $region44
      $region43: #{tpu_custom_call.1} parent=5 // pred_region
        %s367 = ssub.s32 %s15, 2
        // Predicated region
        $region45: #{tpu_custom_call.1} parent=43 // pred_check
          %p368 = pneg %p112
        $region46: #{tpu_custom_call.1} parent=43 // pred_check_branch
          %370 = sbr.rel (%p368) target = $region48
        $region47: #{tpu_custom_call.1} parent=43 // pred_region
          %s371 = sand.u32 %s97, 1
          %s372 = scalar_lea.sflag [#allocation4], %s371
          %s373 = sand.u32 %s97, 1
          %s374 = smul.addr %s373, 16
          %s375 = scalar_lea.vmem [#allocation5], %s374
          %376 = dma.done %s372, 256
        $region48: #{tpu_custom_call.1} parent=43 // pred_fallthru
          _
      $region44: #{tpu_custom_call.1} parent=5 // pred_fallthru
        _
    $region6: #{tpu_custom_call.1} parent=1 // loop_footer
      %s19 = sadd.s32 1, %s15
    $region7: #{tpu_custom_call.1} parent=1 // loop_footer_branch
      %14 = sbr.rel target = $region3
    $region8: #{tpu_custom_call.1} parent=1 // loop_exit
      _
    %377 = vsyncpa [#allocation3], 1
    %s378 = scalar_lea.sflag [#allocation3], 1
    %379 = vsyncpa %s378, 1
    %380 = vsyncpa [#allocation4], 1
    %s381 = scalar_lea.sflag [#allocation4], 1
    %382 = vsyncpa %s381, 1

</llo_original>
